<compile_context>
chip_gen: v5e
topology: v5e:2x2
jax: 0.10.0
libtpu: 0.0.40
codegen_flags: <defaults>
</compile_context>

<pallas_src>
import jax
import jax.numpy as jnp
from jax.experimental import pallas as pl
from jax.experimental.pallas import tpu as pltpu


def _make_kernel(n_layers: int, n_contexts: int):
    L, C = n_layers, n_contexts

    def kernel(x_ref, ctx_ref, gtab_ref, bias_ref, *refs):
        # refs = [w0, ..., w_{L-1}, out]
        out_ref = refs[-1]
        w_refs = refs[:-1]

        hidden = gtab_ref.shape[-1]
        tb = x_ref.shape[0]

        # ---- Pass 1: context gates (ctx-only; independent of h, hoisted off
        # the serial h chain).  tanh(relu(.))**2 is already baked into the
        # gate table, so this is just a VPU compare/select row gather.
        gates = []
        for layer in range(L - 1):
            ids = ctx_ref[:, layer:layer + 1]                       # (tb, 1) int32
            g = jnp.zeros((tb, hidden), jnp.float32)
            for c in range(C):
                row = gtab_ref[layer * C + c:layer * C + c + 1, :]  # (1, hidden)
                g = g + jnp.where(ids == c, row, 0.0)
            gates.append(g)

        # ---- Pass 2: serial h chain (dot -> gate mul -> fused L2 normalize).
        h = x_ref[...].astype(jnp.float32)
        for layer in range(L - 1):
            w = w_refs[layer][...]
            o = w.shape[1]
            b = bias_ref[layer:layer + 1, :o]
            h = jnp.dot(h, w, preferred_element_type=jnp.float32) + b
            h = h * gates[layer]
            # F.normalize(h, dim=1) == h / max(||h||, 1e-12); 1e-24 = (1e-12)^2.
            ss = jnp.sum(h * h, axis=1, keepdims=True)
            h = h * jax.lax.rsqrt(jnp.maximum(ss, 1e-24))

        # ---- Final linear + row softmax (exact reciprocal so rows sum to 1).
        w_last = w_refs[L - 1][...]
        o = w_last.shape[1]
        logits = (jnp.dot(h, w_last, preferred_element_type=jnp.float32)
                  + bias_ref[L - 1:L, :o])
        m = jnp.max(logits, axis=1, keepdims=True)
        e = jnp.exp(logits - m)
        denom = jnp.sum(e, axis=1, keepdims=True)
        out_ref[...] = e * pl.reciprocal(denom, approx=False)

    return kernel


def context_network_forward(x, ctx_onehot, ff_params, proj_params, *,
                            batch_tile=512):
    """Inference forward of `network`.

    x:           (B, input_size) f32
    ctx_onehot:  (B, n_contexts, n_layers-1) one-hot f32  (torch layout)
    ff_params:   n_layers   entries of (W, b), W is (in, out) [transposed vs torch]
    proj_params: n_layers-1 entries of (W, b), W is (n_contexts, hidden)
    """
    B = x.shape[0]
    L = len(ff_params)
    assert L >= 2, "kernel path assumes n_layers >= 2"
    C = proj_params[0][0].shape[0]
    out_size = ff_params[-1][0].shape[1]

    # One-hot context -> integer ids (B, L-1): drops the padded one-hot DMA
    # and the in-kernel MXU matmul against it.
    ctx_ids = jnp.argmax(ctx_onehot, axis=1).astype(jnp.int32)

    # Weights-only gate tables: tanh(relu(Wp + bp))**2, shape ((L-1)*C, hidden).
    gtab = jnp.concatenate(
        [jnp.tanh(jnp.maximum(pw.astype(jnp.float32)
                              + pb.reshape(1, -1).astype(jnp.float32), 0.0)) ** 2
         for pw, pb in proj_params], axis=0)

    # Pack all FF biases into one (L, max_o) array (zero padded on the right).
    max_o = max(b.shape[0] for _, b in ff_params)
    bias_packed = jnp.stack(
        [jnp.pad(b.astype(jnp.float32), (0, max_o - b.shape[0]))
         for _, b in ff_params])

    # TODO(synk): cast weights/h to bf16 for the MXU dots (f32 accumulate) once
    # hidden sizes are non-trivial on v6e/v7x; keep f32 on v5e.
    weights = [w.astype(jnp.float32) for w, _ in ff_params]

    tb = B if B <= batch_tile else batch_tile
    grid = (pl.cdiv(B, tb),)

    def full(shape):
        return pl.BlockSpec(shape, lambda i: (0,) * len(shape))  # resident

    in_specs = [
        pl.BlockSpec((tb, x.shape[1]), lambda i: (i, 0)),   # x, batch-tiled
        pl.BlockSpec((tb, L - 1), lambda i: (i, 0)),        # ctx ids, batch-tiled
        full(gtab.shape),
        full(bias_packed.shape),
    ] + [full(w.shape) for w in weights]

    return pl.pallas_call(
        _make_kernel(L, C),
        out_shape=jax.ShapeDtypeStruct((B, out_size), jnp.float32),
        grid=grid,
        in_specs=in_specs,
        out_specs=pl.BlockSpec((tb, out_size), lambda i: (i, 0)),
        compiler_params=pltpu.CompilerParams(
            dimension_semantics=("parallel",)),
    )(x.astype(jnp.float32), ctx_ids, gtab, bias_packed, *weights)


def reference_forward(x, ctx_onehot, ff_params, proj_params):
    """Pure-JAX reference mirroring the PyTorch inference path."""
    h = x.astype(jnp.float32)
    L = len(ff_params)
    for layer in range(L - 1):
        c = ctx_onehot[:, :, layer]
        pw, pb = proj_params[layer]
        pre = c @ pw + pb.reshape(1, -1)
        gate = jnp.tanh(jnp.where(pre > 0, pre, 0.0)) ** 2
        w, b = ff_params[layer]
        h = h @ w + b.reshape(1, -1)
        h = h * gate
        norm = jnp.sqrt(jnp.sum(h * h, axis=1, keepdims=True))
        h = h / jnp.maximum(norm, 1e-12)
    w, b = ff_params[-1]
    logits = h @ w + b.reshape(1, -1)
    return jax.nn.softmax(logits, axis=1)


def init_params(key, n_layers, n_contexts, input_size, hidden, output_size):
    """Deterministic synthetic init (shapes follow the torch __init__)."""
    ff_params, proj_params = [], []
    for layer in range(n_layers):
        if n_layers == 1:
            i, o = input_size, output_size
        elif layer == 0:
            i, o = input_size, hidden
        elif layer == n_layers - 1:
            i, o = hidden, output_size
        else:
            i, o = hidden, hidden
        key, kw, kb, kp = jax.random.split(key, 4)
        w = jax.random.normal(kw, (i, o), jnp.float32) * (1.0 / jnp.sqrt(i))
        b = jax.random.normal(kb, (o,), jnp.float32) * 0.01
        ff_params.append((w, b))
        if layer != n_layers - 1:
            pw = jax.random.normal(kp, (n_contexts, o), jnp.float32) * (
                1.0 / jnp.sqrt(n_contexts))
            pb = jnp.zeros((o,), jnp.float32)  # torch: proj.bias zero, frozen
            proj_params.append((pw, pb))
    return ff_params, proj_params


# TODO(synk): training-time path (geomloss energy distance, context switching,
# CrossEntropy modulation, availability/age updates, BatchNorm 'sparse' branch)
# is stateful host-side logic and not part of the inference hot path; only the
# inference forward is implemented as a kernel.


if __name__ == "__main__":
    B = 2
    N_CONTEXTS = 4
    N_LAYERS = 3
    INPUT_SIZE = 16
    HIDDEN = 32
    OUTPUT_SIZE = 8

    key = jax.random.PRNGKey(0)
    key, k_params, k_x = jax.random.split(key, 3)

    ff_params, proj_params = init_params(
        k_params, N_LAYERS, N_CONTEXTS, INPUT_SIZE, HIDDEN, OUTPUT_SIZE)

    x = jax.random.normal(k_x, (B, INPUT_SIZE), jnp.float32)

    # One-hot context per sample, replicated per layer (torch layout
    # (B, n_contexts, n_layers-1), indexed [:, :, layer]).
    ctx_ids = jnp.array([1, 3], dtype=jnp.int32)
    ctx_onehot = jax.nn.one_hot(ctx_ids, N_CONTEXTS, dtype=jnp.float32)
    ctx_torch_layout = jnp.repeat(ctx_onehot[:, :, None], N_LAYERS - 1, axis=2)

    out = context_network_forward(x, ctx_torch_layout, ff_params, proj_params)
    out = jax.block_until_ready(out)

    ref = reference_forward(x, ctx_torch_layout, ff_params, proj_params)

    assert out.shape == (B, OUTPUT_SIZE)
    assert bool(jnp.all(jnp.isfinite(out)))
    assert bool(jnp.allclose(jnp.sum(out, axis=1), 1.0, atol=1e-5))
    assert bool(jnp.allclose(out, ref, atol=1e-5, rtol=1e-5))
    print("KERNEL_OK")
</pallas_src>

<mosaic_0001>
module attributes {stable_mosaic.version = 11 : i64} {
  func.func @kernel(%arg0: i32, %arg1: memref<2x16xf32, #tpu.memory_space<vmem>>, %arg2: memref<2x2xi32, #tpu.memory_space<vmem>>, %arg3: memref<8x32xf32, #tpu.memory_space<vmem>>, %arg4: memref<3x32xf32, #tpu.memory_space<vmem>>, %arg5: memref<16x32xf32, #tpu.memory_space<vmem>>, %arg6: memref<32x32xf32, #tpu.memory_space<vmem>>, %arg7: memref<32x8xf32, #tpu.memory_space<vmem>>, %arg8: memref<2x8xf32, #tpu.memory_space<vmem>>) attributes {dimension_semantics = [#tpu.dimension_semantics<parallel>], iteration_bounds = array<i64: 1>, scalar_prefetch = 0 : i64, scratch_operands = 0 : i64, tpu.core_type = #tpu.core_type<tc>, window_params = [{transform_indices = @transform_0, window_bounds = array<i64: 2, 16>}, {transform_indices = @transform_1, window_bounds = array<i64: 2, 2>}, {pipeline_mode = #tpu.pipeline_mode<synchronous>, transform_indices = @transform_2, window_bounds = array<i64: 8, 32>}, {pipeline_mode = #tpu.pipeline_mode<synchronous>, transform_indices = @transform_3, window_bounds = array<i64: 3, 32>}, {pipeline_mode = #tpu.pipeline_mode<synchronous>, transform_indices = @transform_4, window_bounds = array<i64: 16, 32>}, {pipeline_mode = #tpu.pipeline_mode<synchronous>, transform_indices = @transform_5, window_bounds = array<i64: 32, 32>}, {pipeline_mode = #tpu.pipeline_mode<synchronous>, transform_indices = @transform_6, window_bounds = array<i64: 32, 8>}, {transform_indices = @transform_7, window_bounds = array<i64: 2, 8>}]} {
    %c0 = arith.constant 0 : index
    %c0_0 = arith.constant 0 : index
    %0 = vector.load %arg2[%c0, %c0_0] : memref<2x2xi32, #tpu.memory_space<vmem>>, vector<2x1xi32>
    %cst = arith.constant 0.000000e+00 : f32
    %1 = vector.broadcast %cst : f32 to vector<2x32xf32>
    %c0_1 = arith.constant 0 : index
    %c0_2 = arith.constant 0 : index
    %2 = vector.load %arg3[%c0_1, %c0_2] : memref<8x32xf32, #tpu.memory_space<vmem>>, vector<1x32xf32>
    %c0_i32 = arith.constant 0 : i32
    %3 = vector.broadcast %c0_i32 : i32 to vector<2x1xi32>
    %4 = arith.cmpi eq, %0, %3 : vector<2x1xi32>
    %cst_3 = arith.constant 0.000000e+00 : f32
    %5 = vector.shape_cast %4 : vector<2x1xi1> to vector<2x1xi1>
    %6 = vector.broadcast %5 : vector<2x1xi1> to vector<2x32xi1>
    %7 = vector.shape_cast %2 : vector<1x32xf32> to vector<1x32xf32>
    %8 = vector.broadcast %7 : vector<1x32xf32> to vector<2x32xf32>
    %9 = vector.broadcast %cst_3 : f32 to vector<2x32xf32>
    %10 = arith.select %6, %8, %9 : vector<2x32xi1>, vector<2x32xf32>
    %11 = arith.addf %1, %10 : vector<2x32xf32>
    %c1 = arith.constant 1 : index
    %c0_4 = arith.constant 0 : index
    %12 = vector.load %arg3[%c1, %c0_4] : memref<8x32xf32, #tpu.memory_space<vmem>>, vector<1x32xf32>
    %c1_i32 = arith.constant 1 : i32
    %13 = vector.broadcast %c1_i32 : i32 to vector<2x1xi32>
    %14 = arith.cmpi eq, %0, %13 : vector<2x1xi32>
    %cst_5 = arith.constant 0.000000e+00 : f32
    %15 = vector.shape_cast %14 : vector<2x1xi1> to vector<2x1xi1>
    %16 = vector.broadcast %15 : vector<2x1xi1> to vector<2x32xi1>
    %17 = vector.shape_cast %12 : vector<1x32xf32> to vector<1x32xf32>
    %18 = vector.broadcast %17 : vector<1x32xf32> to vector<2x32xf32>
    %19 = vector.broadcast %cst_5 : f32 to vector<2x32xf32>
    %20 = arith.select %16, %18, %19 : vector<2x32xi1>, vector<2x32xf32>
    %21 = arith.addf %11, %20 : vector<2x32xf32>
    %c2 = arith.constant 2 : index
    %c0_6 = arith.constant 0 : index
    %22 = vector.load %arg3[%c2, %c0_6] : memref<8x32xf32, #tpu.memory_space<vmem>>, vector<1x32xf32>
    %c2_i32 = arith.constant 2 : i32
    %23 = vector.broadcast %c2_i32 : i32 to vector<2x1xi32>
    %24 = arith.cmpi eq, %0, %23 : vector<2x1xi32>
    %cst_7 = arith.constant 0.000000e+00 : f32
    %25 = vector.shape_cast %24 : vector<2x1xi1> to vector<2x1xi1>
    %26 = vector.broadcast %25 : vector<2x1xi1> to vector<2x32xi1>
    %27 = vector.shape_cast %22 : vector<1x32xf32> to vector<1x32xf32>
    %28 = vector.broadcast %27 : vector<1x32xf32> to vector<2x32xf32>
    %29 = vector.broadcast %cst_7 : f32 to vector<2x32xf32>
    %30 = arith.select %26, %28, %29 : vector<2x32xi1>, vector<2x32xf32>
    %31 = arith.addf %21, %30 : vector<2x32xf32>
    %c3 = arith.constant 3 : index
    %c0_8 = arith.constant 0 : index
    %32 = vector.load %arg3[%c3, %c0_8] : memref<8x32xf32, #tpu.memory_space<vmem>>, vector<1x32xf32>
    %c3_i32 = arith.constant 3 : i32
    %33 = vector.broadcast %c3_i32 : i32 to vector<2x1xi32>
    %34 = arith.cmpi eq, %0, %33 : vector<2x1xi32>
    %cst_9 = arith.constant 0.000000e+00 : f32
    %35 = vector.shape_cast %34 : vector<2x1xi1> to vector<2x1xi1>
    %36 = vector.broadcast %35 : vector<2x1xi1> to vector<2x32xi1>
    %37 = vector.shape_cast %32 : vector<1x32xf32> to vector<1x32xf32>
    %38 = vector.broadcast %37 : vector<1x32xf32> to vector<2x32xf32>
    %39 = vector.broadcast %cst_9 : f32 to vector<2x32xf32>
    %40 = arith.select %36, %38, %39 : vector<2x32xi1>, vector<2x32xf32>
    %41 = arith.addf %31, %40 : vector<2x32xf32>
    %c0_10 = arith.constant 0 : index
    %c1_11 = arith.constant 1 : index
    %42 = vector.load %arg2[%c0_10, %c1_11] : memref<2x2xi32, #tpu.memory_space<vmem>>, vector<2x1xi32>
    %cst_12 = arith.constant 0.000000e+00 : f32
    %43 = vector.broadcast %cst_12 : f32 to vector<2x32xf32>
    %c4 = arith.constant 4 : index
    %c0_13 = arith.constant 0 : index
    %44 = vector.load %arg3[%c4, %c0_13] : memref<8x32xf32, #tpu.memory_space<vmem>>, vector<1x32xf32>
    %c0_i32_14 = arith.constant 0 : i32
    %45 = vector.broadcast %c0_i32_14 : i32 to vector<2x1xi32>
    %46 = arith.cmpi eq, %42, %45 : vector<2x1xi32>
    %cst_15 = arith.constant 0.000000e+00 : f32
    %47 = vector.shape_cast %46 : vector<2x1xi1> to vector<2x1xi1>
    %48 = vector.broadcast %47 : vector<2x1xi1> to vector<2x32xi1>
    %49 = vector.shape_cast %44 : vector<1x32xf32> to vector<1x32xf32>
    %50 = vector.broadcast %49 : vector<1x32xf32> to vector<2x32xf32>
    %51 = vector.broadcast %cst_15 : f32 to vector<2x32xf32>
    %52 = arith.select %48, %50, %51 : vector<2x32xi1>, vector<2x32xf32>
    %53 = arith.addf %43, %52 : vector<2x32xf32>
    %c5 = arith.constant 5 : index
    %c0_16 = arith.constant 0 : index
    %54 = vector.load %arg3[%c5, %c0_16] : memref<8x32xf32, #tpu.memory_space<vmem>>, vector<1x32xf32>
    %c1_i32_17 = arith.constant 1 : i32
    %55 = vector.broadcast %c1_i32_17 : i32 to vector<2x1xi32>
    %56 = arith.cmpi eq, %42, %55 : vector<2x1xi32>
    %cst_18 = arith.constant 0.000000e+00 : f32
    %57 = vector.shape_cast %56 : vector<2x1xi1> to vector<2x1xi1>
    %58 = vector.broadcast %57 : vector<2x1xi1> to vector<2x32xi1>
    %59 = vector.shape_cast %54 : vector<1x32xf32> to vector<1x32xf32>
    %60 = vector.broadcast %59 : vector<1x32xf32> to vector<2x32xf32>
    %61 = vector.broadcast %cst_18 : f32 to vector<2x32xf32>
    %62 = arith.select %58, %60, %61 : vector<2x32xi1>, vector<2x32xf32>
    %63 = arith.addf %53, %62 : vector<2x32xf32>
    %c6 = arith.constant 6 : index
    %c0_19 = arith.constant 0 : index
    %64 = vector.load %arg3[%c6, %c0_19] : memref<8x32xf32, #tpu.memory_space<vmem>>, vector<1x32xf32>
    %c2_i32_20 = arith.constant 2 : i32
    %65 = vector.broadcast %c2_i32_20 : i32 to vector<2x1xi32>
    %66 = arith.cmpi eq, %42, %65 : vector<2x1xi32>
    %cst_21 = arith.constant 0.000000e+00 : f32
    %67 = vector.shape_cast %66 : vector<2x1xi1> to vector<2x1xi1>
    %68 = vector.broadcast %67 : vector<2x1xi1> to vector<2x32xi1>
    %69 = vector.shape_cast %64 : vector<1x32xf32> to vector<1x32xf32>
    %70 = vector.broadcast %69 : vector<1x32xf32> to vector<2x32xf32>
    %71 = vector.broadcast %cst_21 : f32 to vector<2x32xf32>
    %72 = arith.select %68, %70, %71 : vector<2x32xi1>, vector<2x32xf32>
    %73 = arith.addf %63, %72 : vector<2x32xf32>
    %c7 = arith.constant 7 : index
    %c0_22 = arith.constant 0 : index
    %74 = vector.load %arg3[%c7, %c0_22] : memref<8x32xf32, #tpu.memory_space<vmem>>, vector<1x32xf32>
    %c3_i32_23 = arith.constant 3 : i32
    %75 = vector.broadcast %c3_i32_23 : i32 to vector<2x1xi32>
    %76 = arith.cmpi eq, %42, %75 : vector<2x1xi32>
    %cst_24 = arith.constant 0.000000e+00 : f32
    %77 = vector.shape_cast %76 : vector<2x1xi1> to vector<2x1xi1>
    %78 = vector.broadcast %77 : vector<2x1xi1> to vector<2x32xi1>
    %79 = vector.shape_cast %74 : vector<1x32xf32> to vector<1x32xf32>
    %80 = vector.broadcast %79 : vector<1x32xf32> to vector<2x32xf32>
    %81 = vector.broadcast %cst_24 : f32 to vector<2x32xf32>
    %82 = arith.select %78, %80, %81 : vector<2x32xi1>, vector<2x32xf32>
    %83 = arith.addf %73, %82 : vector<2x32xf32>
    %c0_25 = arith.constant 0 : index
    %c0_26 = arith.constant 0 : index
    %84 = vector.load %arg1[%c0_25, %c0_26] : memref<2x16xf32, #tpu.memory_space<vmem>>, vector<2x16xf32>
    %c0_27 = arith.constant 0 : index
    %c0_28 = arith.constant 0 : index
    %85 = vector.load %arg5[%c0_27, %c0_28] : memref<16x32xf32, #tpu.memory_space<vmem>>, vector<16x32xf32>
    %c0_29 = arith.constant 0 : index
    %c0_30 = arith.constant 0 : index
    %86 = vector.load %arg4[%c0_29, %c0_30] : memref<3x32xf32, #tpu.memory_space<vmem>>, vector<1x32xf32>
    %cst_31 = arith.constant dense<0.000000e+00> : vector<2x32xf32>
    %87 = tpu.matmul %84, %85, %cst_31 {dimension_numbers = #tpu.dot_dimension_numbers<[1], [0], [0], [1], [0, 0, 1, 1], [], []>} : vector<2x16xf32>, vector<16x32xf32>, vector<2x32xf32> -> vector<2x32xf32>
    %88 = vector.broadcast %86 : vector<1x32xf32> to vector<2x32xf32>
    %89 = arith.addf %87, %88 : vector<2x32xf32>
    %90 = arith.mulf %89, %41 : vector<2x32xf32>
    %91 = arith.mulf %90, %90 : vector<2x32xf32>
    %cst_32 = arith.constant dense<0.000000e+00> : vector<2xf32>
    %92 = vector.multi_reduction <add>, %91, %cst_32 [1] : vector<2x32xf32> to vector<2xf32>
    %93 = vector.shape_cast %92 : vector<2xf32> to vector<2x1xf32>
    %cst_33 = arith.constant 1.000000e-24 : f32
    %94 = vector.broadcast %cst_33 : f32 to vector<2x1xf32>
    %95 = arith.maximumf %93, %94 : vector<2x1xf32>
    %96 = math.rsqrt %95 : vector<2x1xf32>
    %97 = vector.broadcast %96 : vector<2x1xf32> to vector<2x32xf32>
    %98 = arith.mulf %90, %97 : vector<2x32xf32>
    %c0_34 = arith.constant 0 : index
    %c0_35 = arith.constant 0 : index
    %99 = vector.load %arg6[%c0_34, %c0_35] : memref<32x32xf32, #tpu.memory_space<vmem>>, vector<32x32xf32>
    %c1_36 = arith.constant 1 : index
    %c0_37 = arith.constant 0 : index
    %100 = vector.load %arg4[%c1_36, %c0_37] : memref<3x32xf32, #tpu.memory_space<vmem>>, vector<1x32xf32>
    %cst_38 = arith.constant dense<0.000000e+00> : vector<2x32xf32>
    %101 = tpu.matmul %98, %99, %cst_38 {dimension_numbers = #tpu.dot_dimension_numbers<[1], [0], [0], [1], [0, 0, 1, 1], [], []>} : vector<2x32xf32>, vector<32x32xf32>, vector<2x32xf32> -> vector<2x32xf32>
    %102 = vector.broadcast %100 : vector<1x32xf32> to vector<2x32xf32>
    %103 = arith.addf %101, %102 : vector<2x32xf32>
    %104 = arith.mulf %103, %83 : vector<2x32xf32>
    %105 = arith.mulf %104, %104 : vector<2x32xf32>
    %cst_39 = arith.constant dense<0.000000e+00> : vector<2xf32>
    %106 = vector.multi_reduction <add>, %105, %cst_39 [1] : vector<2x32xf32> to vector<2xf32>
    %107 = vector.shape_cast %106 : vector<2xf32> to vector<2x1xf32>
    %cst_40 = arith.constant 1.000000e-24 : f32
    %108 = vector.broadcast %cst_40 : f32 to vector<2x1xf32>
    %109 = arith.maximumf %107, %108 : vector<2x1xf32>
    %110 = math.rsqrt %109 : vector<2x1xf32>
    %111 = vector.broadcast %110 : vector<2x1xf32> to vector<2x32xf32>
    %112 = arith.mulf %104, %111 : vector<2x32xf32>
    %c0_41 = arith.constant 0 : index
    %c0_42 = arith.constant 0 : index
    %113 = vector.load %arg7[%c0_41, %c0_42] : memref<32x8xf32, #tpu.memory_space<vmem>>, vector<32x8xf32>
    %cst_43 = arith.constant dense<0.000000e+00> : vector<2x8xf32>
    %114 = tpu.matmul %112, %113, %cst_43 {dimension_numbers = #tpu.dot_dimension_numbers<[1], [0], [0], [1], [0, 0, 1, 1], [], []>} : vector<2x32xf32>, vector<32x8xf32>, vector<2x8xf32> -> vector<2x8xf32>
    %c2_44 = arith.constant 2 : index
    %c0_45 = arith.constant 0 : index
    %115 = vector.load %arg4[%c2_44, %c0_45] : memref<3x32xf32, #tpu.memory_space<vmem>>, vector<1x8xf32>
    %116 = vector.broadcast %115 : vector<1x8xf32> to vector<2x8xf32>
    %117 = arith.addf %114, %116 : vector<2x8xf32>
    %cst_46 = arith.constant dense<0xFF800000> : vector<2xf32>
    %118 = vector.multi_reduction <maximumf>, %117, %cst_46 [1] : vector<2x8xf32> to vector<2xf32>
    %119 = vector.shape_cast %118 : vector<2xf32> to vector<2x1xf32>
    %120 = vector.broadcast %119 : vector<2x1xf32> to vector<2x8xf32>
    %121 = arith.subf %117, %120 : vector<2x8xf32>
    %122 = math.exp %121 : vector<2x8xf32>
    %cst_47 = arith.constant dense<0.000000e+00> : vector<2xf32>
    %123 = vector.multi_reduction <add>, %122, %cst_47 [1] : vector<2x8xf32> to vector<2xf32>
    %124 = vector.shape_cast %123 : vector<2xf32> to vector<2x1xf32>
    %125 = tpu.reciprocal %124 : vector<2x1xf32> -> vector<2x1xf32>
    %126 = vector.broadcast %125 : vector<2x1xf32> to vector<2x8xf32>
    %127 = arith.mulf %122, %126 : vector<2x8xf32>
    %c0_48 = arith.constant 0 : index
    %c0_49 = arith.constant 0 : index
    %128 = vector.load %arg8[%c0_48, %c0_49] : memref<2x8xf32, #tpu.memory_space<vmem>>, vector<2x8xf32>
    tpu.vector_store %arg8[%c0_48, %c0_49], %127 {strides = array<i32>} : memref<2x8xf32, #tpu.memory_space<vmem>>, vector<2x8xf32>,
    return
  }
  func.func @transform_0(%arg0: i32) -> (i32, i32) {
    %c0_i32 = arith.constant 0 : i32
    %c0_i32_0 = arith.constant 0 : i32
    return %arg0, %c0_i32 : i32, i32
  }
  func.func @transform_1(%arg0: i32) -> (i32, i32) {
    %c0_i32 = arith.constant 0 : i32
    %c0_i32_0 = arith.constant 0 : i32
    return %arg0, %c0_i32 : i32, i32
  }
  func.func @transform_2(%arg0: i32) -> (i32, i32) {
    %c0_i32 = arith.constant 0 : i32
    %c0_i32_0 = arith.constant 0 : i32
    %c0_i32_1 = arith.constant 0 : i32
    return %c0_i32, %c0_i32_0 : i32, i32
  }
  func.func @transform_3(%arg0: i32) -> (i32, i32) {
    %c0_i32 = arith.constant 0 : i32
    %c0_i32_0 = arith.constant 0 : i32
    %c0_i32_1 = arith.constant 0 : i32
    return %c0_i32, %c0_i32_0 : i32, i32
  }
  func.func @transform_4(%arg0: i32) -> (i32, i32) {
    %c0_i32 = arith.constant 0 : i32
    %c0_i32_0 = arith.constant 0 : i32
    %c0_i32_1 = arith.constant 0 : i32
    return %c0_i32, %c0_i32_0 : i32, i32
  }
  func.func @transform_5(%arg0: i32) -> (i32, i32) {
    %c0_i32 = arith.constant 0 : i32
    %c0_i32_0 = arith.constant 0 : i32
    %c0_i32_1 = arith.constant 0 : i32
    return %c0_i32, %c0_i32_0 : i32, i32
  }
  func.func @transform_6(%arg0: i32) -> (i32, i32) {
    %c0_i32 = arith.constant 0 : i32
    %c0_i32_0 = arith.constant 0 : i32
    %c0_i32_1 = arith.constant 0 : i32
    return %c0_i32, %c0_i32_0 : i32, i32
  }
  func.func @transform_7(%arg0: i32) -> (i32, i32) {
    %c0_i32 = arith.constant 0 : i32
    %c0_i32_0 = arith.constant 0 : i32
    return %arg0, %c0_i32 : i32, i32
  }
}

</mosaic_0001>

<llo_original>
// kernel: tpu_custom_call.1
$region0: #{tpu_custom_call.1}
  #allocation0 [shape = 'u32[]', space=smem, size = 0x4, offset = 0x4, fixed_abs, tag = 'smem constant byte address 0x4 - core index']
  #allocation1 [shape = 'u32[72,128]{1,0:T(1,128)}', space=vmem, size = 0x9000, scoped, tag = 'internal scratch']
  %s0 = inlined_call_operand.hbm [shape: f32[2,16], index: 0, kind: input, shape index: {}]
  %s1 = inlined_call_operand.hbm [shape: s32[2,2], index: 1, kind: input, shape index: {}]
  %s2 = inlined_call_operand.vmem [shape: f32[8,32], index: 2, kind: input, shape index: {}]
  %s3 = inlined_call_operand.vmem [shape: f32[3,32], index: 3, kind: input, shape index: {}]
  %s4 = inlined_call_operand.hbm [shape: f32[16,32], index: 4, kind: input, shape index: {}]
  %s5 = inlined_call_operand.vmem [shape: f32[32,32], index: 5, kind: input, shape index: {}]
  %s6 = inlined_call_operand.vmem [shape: f32[32,8], index: 6, kind: input, shape index: {}]
  %s7 = inlined_call_operand.hbm [shape: f32[2,8], index: 7, kind: output, shape index: {}]
  %s8 = sld [smem:[#allocation0]]
  $region50: #{tpu_custom_call.1} parent=0
    _
  %s10 = ssub.s32 1, %s8
  %s11 = scalar_select 0, %s10, %s8
  $region1: #{tpu_custom_call.1} parent=0
    #allocation2 [shape = 'u8[1024]{0}', space=vmem, size = 0x400, scoped, tag = 'input window, operand 0, single buffered']
    #allocation3 [shape = 's32[1]{0}', space=sflag, size = 0x4, scoped, tag = 'scoped memory for tpu_custom_call.1']
    #allocation4 [shape = 's32[1]{0}', space=sflag, size = 0x4, scoped, tag = 'scoped memory for tpu_custom_call.1']
    #allocation5 [shape = 'u8[1024]{0}', space=vmem, size = 0x400, scoped, tag = 'input window, operand 1, single buffered']
    #allocation6 [shape = 's32[1]{0}', space=sflag, size = 0x4, scoped, tag = 'scoped memory for tpu_custom_call.1']
    #allocation7 [shape = 'u8[8192]{0}', space=vmem, size = 0x2000, scoped, tag = 'input window, operand 4, single buffered']
    #allocation8 [shape = 'u8[1024]{0}', space=vmem, size = 0x400, scoped, tag = 'output window, operand 0, single buffered']
    %12 = vsyncpa [#allocation3], 0
    %13 = vsyncpa [#allocation6], 0
    %14 = vsyncpa [#allocation4], 0
    // Predicated region
    $region2: #{tpu_custom_call.1} parent=1 // pred_check
      _
    $region3: #{tpu_custom_call.1} parent=1 // pred_check_branch
      %16 = sbr.rel (0) target = $region5
    $region4: #{tpu_custom_call.1} parent=1 // pred_region
      %18 = vsyncadd [#allocation3], 0
      %s20 = sshll.u32 %s0, 4
      %s21 = int_to_ptr.hbm [resolvable:$true] %s20
      %s22 = sshll.u32 [#allocation2], 4
      %s23 = int_to_ptr.vmem [resolvable:$true] %s22
      %25 = dma.hbm_to_vmem [thread:$0]  %s21, 32, %s23, [#allocation3]
    $region5: #{tpu_custom_call.1} parent=1 // pred_fallthru
      _
    // Predicated region
    $region6: #{tpu_custom_call.1} parent=1 // pred_check
      _
    $region7: #{tpu_custom_call.1} parent=1 // pred_check_branch
      %27 = sbr.rel (0) target = $region9
    $region8: #{tpu_custom_call.1} parent=1 // pred_region
      %29 = vsyncadd [#allocation6], 0
      %s31 = sshll.u32 %s1, 4
      %s32 = int_to_ptr.hbm [resolvable:$true] %s31
      %s33 = sshll.u32 [#allocation5], 4
      %s34 = int_to_ptr.vmem [resolvable:$true] %s33
      %36 = dma.hbm_to_vmem [thread:$0]  %s32, 32, %s34, [#allocation6]
    $region9: #{tpu_custom_call.1} parent=1 // pred_fallthru
      _
    // Predicated region
    $region10: #{tpu_custom_call.1} parent=1 // pred_check
      _
    $region11: #{tpu_custom_call.1} parent=1 // pred_check_branch
      %38 = sbr.rel (0) target = $region13
    $region12: #{tpu_custom_call.1} parent=1 // pred_region
      _
    $region13: #{tpu_custom_call.1} parent=1 // pred_fallthru
      _
    // Predicated region
    $region14: #{tpu_custom_call.1} parent=1 // pred_check
      _
    $region15: #{tpu_custom_call.1} parent=1 // pred_check_branch
      %40 = sbr.rel (0) target = $region17
    $region16: #{tpu_custom_call.1} parent=1 // pred_region
      _
    $region17: #{tpu_custom_call.1} parent=1 // pred_fallthru
      _
    // Predicated region
    $region18: #{tpu_custom_call.1} parent=1 // pred_check
      _
    $region19: #{tpu_custom_call.1} parent=1 // pred_check_branch
      %42 = sbr.rel (0) target = $region21
    $region20: #{tpu_custom_call.1} parent=1 // pred_region
      %44 = vsyncadd [#allocation6], 0
      %s45 = sshll.u32 %s4, 4
      %s46 = int_to_ptr.hbm [resolvable:$true] %s45
      %s47 = sshll.u32 [#allocation7], 4
      %s48 = int_to_ptr.vmem [resolvable:$true] %s47
      %53 = dma.hbm_to_vmem [thread:$0]  %s46, 256, %s48, [#allocation6], 128, 128, 8
    $region21: #{tpu_custom_call.1} parent=1 // pred_fallthru
      _
    // Predicated region
    $region22: #{tpu_custom_call.1} parent=1 // pred_check
      _
    $region23: #{tpu_custom_call.1} parent=1 // pred_check_branch
      %55 = sbr.rel (0) target = $region25
    $region24: #{tpu_custom_call.1} parent=1 // pred_region
      _
    $region25: #{tpu_custom_call.1} parent=1 // pred_fallthru
      _
    // Predicated region
    $region26: #{tpu_custom_call.1} parent=1 // pred_check
      _
    $region27: #{tpu_custom_call.1} parent=1 // pred_check_branch
      %57 = sbr.rel (0) target = $region29
    $region28: #{tpu_custom_call.1} parent=1 // pred_region
      _
    $region29: #{tpu_custom_call.1} parent=1 // pred_fallthru
      _
    // Predicated region
    $region30: #{tpu_custom_call.1} parent=1 // pred_check
      _
    $region31: #{tpu_custom_call.1} parent=1 // pred_check_branch
      %59 = sbr.rel (0) target = $region33
    $region32: #{tpu_custom_call.1} parent=1 // pred_region
      %61 = dma.done [#allocation3], 32
    $region33: #{tpu_custom_call.1} parent=1 // pred_fallthru
      _
    // Predicated region
    $region34: #{tpu_custom_call.1} parent=1 // pred_check
      _
    $region35: #{tpu_custom_call.1} parent=1 // pred_check_branch
      %63 = sbr.rel (0) target = $region37
    $region36: #{tpu_custom_call.1} parent=1 // pred_region
      %65 = dma.done [#allocation6], 32
    $region37: #{tpu_custom_call.1} parent=1 // pred_fallthru
      _
    // Predicated region
    $region38: #{tpu_custom_call.1} parent=1 // pred_check
      _
    $region39: #{tpu_custom_call.1} parent=1 // pred_check_branch
      %67 = sbr.rel (0) target = $region41
    $region40: #{tpu_custom_call.1} parent=1 // pred_region
      %69 = dma.done [#allocation6], 256
    $region41: #{tpu_custom_call.1} parent=1 // pred_fallthru
      _
    %v70 = vld [vmem:[#allocation5] sm:$0x3]
    %v71 = vld [vmem:[%s2] sm:$0x1]
    %vm72 = vcmp.eq.s32.totalorder %v70, 0
    %v73 = vsel %vm72, 1, 0
    %74 = vset.pattern.permute.xlu0 0
    %75 = vperm.xlu0 %74, %v73
    %v76 = vpop.permute.xlu0 %75
    %vm77 = vcmp.eq.s32.totalorder %v76, 1
    %v78 = vperm.slane %v71, 0
    %v79 = vsel %vm77, %v78, 0.0
    %v80 = vadd.f32 %v79, 0.0
    %v81 = vld [vmem:[%s2 + $0x1] sm:$0x1]
    %vm82 = vcmp.eq.s32.totalorder %v70, 1
    %v83 = vsel %vm82, 1, 0
    %84 = vset.pattern.permute.xlu0 0
    %85 = vperm.xlu0 %84, %v83
    %v86 = vpop.permute.xlu0 %85
    %vm87 = vcmp.eq.s32.totalorder %v86, 1
    %v88 = vperm.slane %v81, 0
    %v89 = vsel %vm87, %v88, 0.0
    %v90 = vadd.f32 %v80, %v89
    %v91 = vld [vmem:[%s2 + $0x2] sm:$0x1]
    %vm92 = vcmp.eq.s32.totalorder %v70, 2
    %v93 = vsel %vm92, 1, 0
    %94 = vset.pattern.permute.xlu0 0
    %95 = vperm.xlu0 %94, %v93
    %v96 = vpop.permute.xlu0 %95
    %vm97 = vcmp.eq.s32.totalorder %v96, 1
    %v98 = vperm.slane %v91, 0
    %v99 = vsel %vm97, %v98, 0.0
    %v100 = vadd.f32 %v90, %v99
    %v101 = vld [vmem:[%s2 + $0x3] sm:$0x1]
    %vm102 = vcmp.eq.s32.totalorder %v70, 3
    %v103 = vsel %vm102, 1, 0
    %104 = vset.pattern.permute.xlu0 0
    %105 = vperm.xlu0 %104, %v103
    %v106 = vpop.permute.xlu0 %105
    %vm107 = vcmp.eq.s32.totalorder %v106, 1
    %v108 = vperm.slane %v101, 0
    %v109 = vsel %vm107, %v108, 0.0
    %v110 = vadd.f32 %v100, %v109
    %v111 = vld [vmem:[%s2 + $0x4] sm:$0x1]
    %112 = vset.pattern.permute.xlu0 1
    %113 = vperm.xlu0 %112, %v73
    %v114 = vpop.permute.xlu0 %113
    %vm115 = vcmp.eq.s32.totalorder %v114, 1
    %v116 = vperm.slane %v111, 0
    %v117 = vsel %vm115, %v116, 0.0
    %v118 = vadd.f32 %v117, 0.0
    %v119 = vld [vmem:[%s2 + $0x5] sm:$0x1]
    %120 = vset.pattern.permute.xlu0 1
    %121 = vperm.xlu0 %120, %v83
    %v122 = vpop.permute.xlu0 %121
    %vm123 = vcmp.eq.s32.totalorder %v122, 1
    %v124 = vperm.slane %v119, 0
    %v125 = vsel %vm123, %v124, 0.0
    %v126 = vadd.f32 %v118, %v125
    %v127 = vld [vmem:[%s2 + $0x6] sm:$0x1]
    %128 = vset.pattern.permute.xlu0 1
    %129 = vperm.xlu0 %128, %v93
    %v130 = vpop.permute.xlu0 %129
    %vm131 = vcmp.eq.s32.totalorder %v130, 1
    %v132 = vperm.slane %v127, 0
    %v133 = vsel %vm131, %v132, 0.0
    %v134 = vadd.f32 %v126, %v133
    %v135 = vld [vmem:[%s2 + $0x7] sm:$0x1]
    %136 = vset.pattern.permute.xlu0 1
    %137 = vperm.xlu0 %136, %v103
    %v138 = vpop.permute.xlu0 %137
    %vm139 = vcmp.eq.s32.totalorder %v138, 1
    %v140 = vperm.slane %v135, 0
    %v141 = vsel %vm139, %v140, 0.0
    %v142 = vadd.f32 %v134, %v141
    %v143 = vld [vmem:[#allocation2] sm:$0x3]
    %v144 = vld [vmem:[#allocation7] sm:$0xff]
    %v145 = vld [vmem:[#allocation7 + $0x8] sm:$0xff]
    %v146 = vld [vmem:[%s3] sm:$0x1]
    %v147 = vperm.slane %v146, 0
    %vm148 = vcmask 130048
    %v150 = vsel %vm148, %v143, 0
    %152 = vmatpush.msra.mxu0 0.0
    %153 = vmatpush.msra.mxu0 0.0
    %154 = vmatpush.msra.mxu0 0.0
    %155 = vmatpush.msra.mxu0 0.0
    %156 = vmatpush.msra.mxu0 0.0
    %157 = vmatpush.msra.mxu0 0.0
    %158 = vmatpush.msra.mxu0 0.0
    %159 = vmatpush.msra.mxu0 0.0
    %160 = vmatpush.msra.mxu0 0.0
    %161 = vmatpush.msra.mxu0 0.0
    %162 = vmatpush.msra.mxu0 0.0
    %163 = vmatpush.msra.mxu0 0.0
    %164 = vmatpush.msra.mxu0 0.0
    %165 = vmatpush.msra.mxu0 0.0
    %166 = vmatpush.msra.mxu0 %v145
    %167 = vmatpush.msra.mxu0 %v144
    %168 = vmatmul.f32.gmra.mxu0 %v150
    %v169 = vpop.f32.mrf.mxu0
    %v170 = vadd.f32 %v147, %v169
    %171 = vdwg.mxu0
    %v172 = vmul.f32 %v170, %v110
    %v173 = vmul.f32 %v172, %v172
    %vm174 = vcmask 254976
    %v175 = vsel %vm174, %v173, 0.0
    %176 = vadd.xlane.f32.xlu0 %v175
    %v177 = vpop.xlane.xlu0 %176
    %v178 = vmax.f32 %v177, 1e-24
    %v179 = vrsqrt.pop %v178
    %v180 = vmul.f32 %v179, %v178
    %v181 = vmul.f32 %v180, %v179
    %v182 = vmul.f32 0.5, %v181
    %v183 = vsub.f32 1.5, %v182
    %v184 = vmul.f32 %v179, %v183
    %vm185 = vweird.f32 %v178
    %vm186 = vweird.f32 %v179
    %vm187 = vmor %vm185, %vm186
    %v188 = vsel %vm187, %v179, %v184
    %v189 = vmul.f32 %v172, %v188
    %v190 = vld [vmem:[%s5] sm:$0xff]
    %v191 = vld [vmem:[%s5 + $0x8] sm:$0xff]
    %v192 = vld [vmem:[%s5 + $0x10] sm:$0xff]
    %v193 = vld [vmem:[%s5 + $0x18] sm:$0xff]
    %v194 = vld [vmem:[%s3 + $0x1] sm:$0x1]
    %v195 = vperm.slane %v194, 0
    %vm196 = vcmask 261120
    %v198 = vsel %vm196, %v189, 0
    %200 = vmatpush.msra.mxu0 0.0
    %201 = vmatpush.msra.mxu0 0.0
    %202 = vmatpush.msra.mxu0 0.0
    %203 = vmatpush.msra.mxu0 0.0
    %204 = vmatpush.msra.mxu0 0.0
    %205 = vmatpush.msra.mxu0 0.0
    %206 = vmatpush.msra.mxu0 0.0
    %207 = vmatpush.msra.mxu0 0.0
    %208 = vmatpush.msra.mxu0 0.0
    %209 = vmatpush.msra.mxu0 0.0
    %210 = vmatpush.msra.mxu0 0.0
    %211 = vmatpush.msra.mxu0 0.0
    %212 = vmatpush.msra.mxu0 %v193
    %213 = vmatpush.msra.mxu0 %v192
    %214 = vmatpush.msra.mxu0 %v191
    %215 = vmatpush.msra.mxu0 %v190
    %216 = vmatmul.f32.gmra.mxu0 %v198
    %v217 = vpop.f32.mrf.mxu0
    %v218 = vadd.f32 %v195, %v217
    %219 = vdwg.mxu0
    %v220 = vmul.f32 %v218, %v142
    %v221 = vmul.f32 %v220, %v220
    %v222 = vsel %vm174, %v221, 0.0
    %223 = vadd.xlane.f32.xlu0 %v222
    %v224 = vpop.xlane.xlu0 %223
    %v225 = vmax.f32 %v224, 1e-24
    %v226 = vrsqrt.pop %v225
    %v227 = vmul.f32 %v226, %v225
    %v228 = vmul.f32 %v227, %v226
    %v229 = vmul.f32 0.5, %v228
    %v230 = vsub.f32 1.5, %v229
    %v231 = vmul.f32 %v226, %v230
    %vm232 = vweird.f32 %v225
    %vm233 = vweird.f32 %v226
    %vm234 = vmor %vm232, %vm233
    %v235 = vsel %vm234, %v226, %v231
    %v236 = vmul.f32 %v220, %v235
    %v237 = vld [vmem:[%s6] sm:$0xff]
    %v238 = vld [vmem:[%s6 + $0x8] sm:$0xff]
    %v239 = vld [vmem:[%s6 + $0x10] sm:$0xff]
    %v240 = vld [vmem:[%s6 + $0x18] sm:$0xff]
    %v241 = vld [vmem:[%s3 + $0x2] sm:$0x1]
    %v242 = vperm.slane %v241, 0
    %v244 = vsel %vm196, %v236, 0
    %246 = vmatpush.msra.mxu0 0.0
    %247 = vmatpush.msra.mxu0 0.0
    %248 = vmatpush.msra.mxu0 0.0
    %249 = vmatpush.msra.mxu0 0.0
    %250 = vmatpush.msra.mxu0 0.0
    %251 = vmatpush.msra.mxu0 0.0
    %252 = vmatpush.msra.mxu0 0.0
    %253 = vmatpush.msra.mxu0 0.0
    %254 = vmatpush.msra.mxu0 0.0
    %255 = vmatpush.msra.mxu0 0.0
    %256 = vmatpush.msra.mxu0 0.0
    %257 = vmatpush.msra.mxu0 0.0
    %258 = vmatpush.msra.mxu0 %v240
    %259 = vmatpush.msra.mxu0 %v239
    %260 = vmatpush.msra.mxu0 %v238
    %261 = vmatpush.msra.mxu0 %v237
    %262 = vmatmul.f32.gmra.mxu0 %v244
    %v263 = vpop.f32.mrf.mxu0
    %v264 = vadd.f32 %v242, %v263
    %265 = vdwg.mxu0
    %vm266 = vcmask 58368
    %v267 = vsel %vm266, %v264, -inf
    %268 = vmax.xlane.f32.xlu0 %v267
    %v269 = vpop.xlane.xlu0 %268
    %v270 = vsub.f32 %v264, %v269
    %v271 = vmul.f32 %v270, 1.442695
    %v272 = vpow.pop %v271
    %v273 = vsel %vm266, %v272, 0.0
    %274 = vadd.xlane.f32.xlu0 %v273
    %v275 = vpop.xlane.xlu0 %274
    %v276 = vrcp.pop %v275
    %v277 = vmul.f32 %v275, %v276
    %v278 = vsub.f32 1.0, %v277
    %v279 = vmul.f32 %v276, %v278
    %v280 = vadd.f32 %v276, %v279
    %vm281 = vweird.f32 %v275
    %vm282 = vweird.f32 %v276
    %vm283 = vmor %vm281, %vm282
    %v284 = vsel %vm283, %v276, %v280
    %v285 = vand.u32 2147483647, %v275
    %vm286 = vcmp.eq.f32.partialorder %v285, 8.507059e+37
    %v287 = vand.u32 %v275, 2147483648
    %v288 = vor.u32 1.1754944e-38, %v287
    %v289 = vsel %vm286, %v288, %v284
    %v290 = vmul.f32 %v272, %v289
    %291 = vst.msk [vmem:[#allocation8] sm:$0x3] %vm266, %v290
    // Predicated region
    $region42: #{tpu_custom_call.1} parent=1 // pred_check
      _
    $region43: #{tpu_custom_call.1} parent=1 // pred_check_branch
      %293 = sbr.rel (0) target = $region45
    $region44: #{tpu_custom_call.1} parent=1 // pred_region
      %295 = vsyncadd [#allocation4], 0
      %s297 = sshll.u32 [#allocation8], 4
      %s298 = int_to_ptr.vmem [resolvable:$true] %s297
      %s299 = sshll.u32 %s7, 4
      %s300 = int_to_ptr.hbm [resolvable:$true] %s299
      %302 = dma.vmem_to_hbm [thread:$0]  %s298, 32, %s300, [#allocation4]
    $region45: #{tpu_custom_call.1} parent=1 // pred_fallthru
      _
    // Predicated region
    $region46: #{tpu_custom_call.1} parent=1 // pred_check
      _
    $region47: #{tpu_custom_call.1} parent=1 // pred_check_branch
      %304 = sbr.rel (0) target = $region49
    $region48: #{tpu_custom_call.1} parent=1 // pred_region
      %306 = dma.done [#allocation4], 32
    $region49: #{tpu_custom_call.1} parent=1 // pred_fallthru
      _
    %307 = vsyncpa [#allocation3], 1
    %308 = vsyncpa [#allocation6], 1
    %309 = vsyncpa [#allocation4], 1

</llo_original>
